<compile_context>
chip_gen: v7x
topology: tpu7x:2x2x1
jax: 0.10.0
libtpu: 0.0.40
codegen_flags: <defaults>
</compile_context>

<pallas_src>
import jax
import jax.numpy as jnp
from jax.experimental import pallas as pl
from jax.experimental.pallas import tpu as pltpu

DROPOUT_RATE = 0.3
BN_EPS = 1e-5

_VMEM_LIMIT_BYTES = 32 * 1024 * 1024      # explicit scoped-VMEM limit (safe on v5e/v6e/v7x)
_PIPELINE_VMEM_BUDGET = 20 * 1024 * 1024  # target for live kernel buffers (w + 2x in + 2x out)


def _round_up(a, b):
    return (a + b - 1) // b * b


def _choose_block_rows(rows, kdim, cout_p, x_bytes, out_bytes, w_bytes):
    """VMEM-budget-aware row tile; >=2 grid steps; row padding <= one tile."""
    per_row = 2 * kdim * x_bytes + 2 * cout_p * out_bytes   # double-buffered input + output
    weight = kdim * cout_p * w_bytes                        # single-buffered (pl.Buffered(1))
    avail = max(_PIPELINE_VMEM_BUDGET - weight, 8 * per_row)
    cap = min(1024, max(8, (avail // per_row) // 8 * 8))
    # >=2 steps so both v7x TensorCores get work; tile sized so padding wastes <= one tile.
    num_tiles = max(2, pl.cdiv(rows, cap))
    return _round_up(pl.cdiv(rows, num_tiles), 8)


def _transition_kernel(x_ref, scale_ref, shift_ref, w_ref, o_ref):
    """Fused BN + ReLU + (pool-folded) 1x1 conv for one row tile.

    x_ref:     (block_rows, 4*Cin)  pool-quadrant-packed activations
    scale_ref: (1, 4*Cin)           folded BN scale (tiled per quadrant)
    shift_ref: (1, 4*Cin)           folded BN shift (tiled per quadrant)
    w_ref:     (4*Cin, Cout_pad)    conv weight, replicated x4 and scaled by 0.25,
                                    zero-padded to a lane-dense Cout
    o_ref:     (block_rows, Cout_pad)
    """
    # BN (eval) + ReLU on the VPU, in f32 (safe on v5e; cheap everywhere).
    x = x_ref[...].astype(jnp.float32)
    y = jnp.maximum(x * scale_ref[...] + shift_ref[...], 0.0)
    # 1x1 conv with the 2x2 average pool folded into the contraction (K = 4*Cin), on the MXU.
    # Operands take the weight dtype (bf16 native path on v6e/v7x if weights are bf16).
    z = jnp.dot(y.astype(w_ref.dtype), w_ref[...], preferred_element_type=jnp.float32)
    o_ref[...] = z.astype(o_ref.dtype)


@jax.jit
def transition_block_forward(x_nchw, gamma, beta, running_mean, running_var, conv_w):
    """x_nchw: (N, Cin, H, W). conv_w: (Cout, Cin, 1, 1). Returns (N, Cout, H/2, W/2)."""
    n, cin, h, w = x_nchw.shape
    cout = conv_w.shape[0]
    assert h % 2 == 0 and w % 2 == 0, "avg_pool2d(2) path assumes even H, W"
    ho, wo = h // 2, w // 2
    rows = n * ho * wo
    kdim = 4 * cin
    cout_p = _round_up(max(cout, 128), 128)          # lane-dense output width

    # ---- parameter folding (tiny, plain JAX) ----
    scale = gamma / jnp.sqrt(running_var + BN_EPS)                 # (Cin,)
    shift = beta - running_mean * scale                            # (Cin,)
    scale_cat = jnp.tile(scale, 4).reshape(1, kdim).astype(jnp.float32)
    shift_cat = jnp.tile(shift, 4).reshape(1, kdim).astype(jnp.float32)
    w_mat = conv_w[:, :, 0, 0].T                                   # (Cin, Cout)
    # Pool folded into conv: replicate per quadrant, scale by 1/4. (DenseNet Cin is a multiple
    # of 32, so kdim = 4*Cin is 128-aligned at real sizes; tiny test Cin is left unpadded.)
    w_cat = jnp.concatenate([w_mat] * 4, axis=0) * 0.25
    w_pad = jnp.zeros((kdim, cout_p), dtype=w_cat.dtype).at[:, :cout].set(w_cat)

    # ---- layout plumbing: ONE transpose pass NCHW -> (rows, 4*Cin) quadrant-packed slab ----
    # element (n, i, j, a, b, c) = x[n, c, 2i+a, 2j+b]; reshapes are free, transpose is 1 copy.
    x_q = x_nchw.reshape(n, cin, ho, 2, wo, 2)
    x_q = jnp.transpose(x_q, (0, 2, 4, 3, 5, 1))                   # (N, Ho, Wo, 2, 2, Cin)
    x_q = x_q.reshape(rows, kdim)

    block_rows = _choose_block_rows(
        rows, kdim, cout_p,
        x_q.dtype.itemsize, x_nchw.dtype.itemsize, w_pad.dtype.itemsize)
    grid_steps = pl.cdiv(rows, block_rows)
    rows_p = grid_steps * block_rows
    if rows_p != rows:
        # Padded rows evaluate relu(shift) + matmul -> nonzero garbage rows; they are sliced
        # off below, so this is wasted work only, never a correctness issue.
        x_q = jnp.pad(x_q, ((0, rows_p - rows), (0, 0)))

    const_buf = pl.Buffered(1)   # grid-invariant operands: single-buffered (halves their VMEM)
    out_p = pl.pallas_call(
        _transition_kernel,
        out_shape=jax.ShapeDtypeStruct((rows_p, cout_p), x_nchw.dtype),
        grid=(grid_steps,),
        in_specs=[
            pl.BlockSpec((block_rows, kdim), lambda i: (i, 0)),
            pl.BlockSpec((1, kdim), lambda i: (0, 0), pipeline_mode=const_buf),
            pl.BlockSpec((1, kdim), lambda i: (0, 0), pipeline_mode=const_buf),
            pl.BlockSpec((kdim, cout_p), lambda i: (0, 0), pipeline_mode=const_buf),
        ],
        out_specs=pl.BlockSpec((block_rows, cout_p), lambda i: (i, 0)),
        compiler_params=pltpu.CompilerParams(
            dimension_semantics=("parallel",),
            vmem_limit_bytes=_VMEM_LIMIT_BYTES),
    )(x_q, scale_cat, shift_cat, w_pad)

    # ---- strip padding; back to NCHW (one pass over the 4x-smaller output).
    # TODO(synk): an NHWC-consuming downstream layer could take out_p directly and skip this.
    out = out_p[:rows, :cout].reshape(n, ho, wo, cout)
    return jnp.transpose(out, (0, 3, 1, 2))


def _reference_forward(x_nchw, gamma, beta, running_mean, running_var, conv_w):
    """Pure-JAX reference of the PyTorch forward (eval mode)."""
    g = gamma[None, :, None, None]
    b = beta[None, :, None, None]
    m = running_mean[None, :, None, None]
    v = running_var[None, :, None, None]
    out = (x_nchw - m) / jnp.sqrt(v + BN_EPS) * g + b
    out = jnp.maximum(out, 0.0)
    out = jax.lax.conv_general_dilated(
        out, conv_w, window_strides=(1, 1), padding="VALID",
        dimension_numbers=("NCHW", "OIHW", "NCHW"))
    # dropout: identity (eval)
    out = jax.lax.reduce_window(
        out, 0.0, jax.lax.add, (1, 1, 2, 2), (1, 1, 2, 2), "VALID") / 4.0
    return out


if __name__ == "__main__":
    N, CIN, COUT, H, W = 2, 4, 8, 16, 16

    key = jax.random.PRNGKey(0)
    kx, kw = jax.random.split(key)

    x = jax.random.normal(kx, (N, CIN, H, W), dtype=jnp.float32)

    # Deterministic parameter init (shapes per nn.BatchNorm2d / nn.Conv2d(1x1, bias=False)).
    gamma = 1.0 + 0.1 * jnp.arange(CIN, dtype=jnp.float32)
    beta = 0.05 * jnp.arange(CIN, dtype=jnp.float32)
    running_mean = 0.01 * jnp.arange(CIN, dtype=jnp.float32)
    running_var = 1.0 + 0.02 * jnp.arange(CIN, dtype=jnp.float32)
    conv_w = 0.1 * jax.random.normal(kw, (COUT, CIN, 1, 1), dtype=jnp.float32)

    out = transition_block_forward(x, gamma, beta, running_mean, running_var, conv_w)
    out = jax.block_until_ready(out)

    ref = _reference_forward(x, gamma, beta, running_mean, running_var, conv_w)
    assert out.shape == (N, COUT, H // 2, W // 2), out.shape
    err = float(jnp.max(jnp.abs(out - ref)))
    assert jnp.allclose(out, ref, atol=2e-5, rtol=1e-5), err

    print("KERNEL_OK")
</pallas_src>

<mosaic_0001>
module attributes {stable_mosaic.version = 11 : i64} {
  func.func @_transition_kernel(%arg0: i32, %arg1: memref<64x16xf32, #tpu.memory_space<vmem>>, %arg2: memref<1x16xf32, #tpu.memory_space<vmem>>, %arg3: memref<1x16xf32, #tpu.memory_space<vmem>>, %arg4: memref<16x128xf32, #tpu.memory_space<vmem>>, %arg5: memref<64x128xf32, #tpu.memory_space<vmem>>) attributes {dimension_semantics = [#tpu.dimension_semantics<parallel>], iteration_bounds = array<i64: 2>, scalar_prefetch = 0 : i64, scratch_operands = 0 : i64, tpu.core_type = #tpu.core_type<tc>, window_params = [{transform_indices = @transform_0, window_bounds = array<i64: 64, 16>}, {pipeline_mode = #tpu.pipeline_mode<synchronous>, transform_indices = @transform_1, window_bounds = array<i64: 1, 16>}, {pipeline_mode = #tpu.pipeline_mode<synchronous>, transform_indices = @transform_2, window_bounds = array<i64: 1, 16>}, {pipeline_mode = #tpu.pipeline_mode<synchronous>, transform_indices = @transform_3, window_bounds = array<i64: 16, 128>}, {transform_indices = @transform_4, window_bounds = array<i64: 64, 128>}]} {
    %c0 = arith.constant 0 : index
    %c0_0 = arith.constant 0 : index
    %0 = vector.load %arg1[%c0, %c0_0] : memref<64x16xf32, #tpu.memory_space<vmem>>, vector<64x16xf32>
    %c0_1 = arith.constant 0 : index
    %c0_2 = arith.constant 0 : index
    %1 = vector.load %arg2[%c0_1, %c0_2] : memref<1x16xf32, #tpu.memory_space<vmem>>, vector<1x16xf32>
    %2 = vector.broadcast %1 : vector<1x16xf32> to vector<64x16xf32>
    %3 = arith.mulf %0, %2 : vector<64x16xf32>
    %c0_3 = arith.constant 0 : index
    %c0_4 = arith.constant 0 : index
    %4 = vector.load %arg3[%c0_3, %c0_4] : memref<1x16xf32, #tpu.memory_space<vmem>>, vector<1x16xf32>
    %5 = vector.broadcast %4 : vector<1x16xf32> to vector<64x16xf32>
    %6 = arith.addf %3, %5 : vector<64x16xf32>
    %cst = arith.constant 0.000000e+00 : f32
    %7 = vector.broadcast %cst : f32 to vector<64x16xf32>
    %8 = arith.maximumf %6, %7 : vector<64x16xf32>
    %c0_5 = arith.constant 0 : index
    %c0_6 = arith.constant 0 : index
    %9 = vector.load %arg4[%c0_5, %c0_6] : memref<16x128xf32, #tpu.memory_space<vmem>>, vector<16x128xf32>
    %cst_7 = arith.constant dense<0.000000e+00> : vector<64x128xf32>
    %10 = tpu.matmul %8, %9, %cst_7 {dimension_numbers = #tpu.dot_dimension_numbers<[1], [0], [0], [1], [0, 0, 1, 1], [], []>} : vector<64x16xf32>, vector<16x128xf32>, vector<64x128xf32> -> vector<64x128xf32>
    %c0_8 = arith.constant 0 : index
    %c0_9 = arith.constant 0 : index
    %11 = vector.load %arg5[%c0_8, %c0_9] : memref<64x128xf32, #tpu.memory_space<vmem>>, vector<64x128xf32>
    tpu.vector_store %arg5[%c0_8, %c0_9], %10 {strides = array<i32>} : memref<64x128xf32, #tpu.memory_space<vmem>>, vector<64x128xf32>,
    return
  }
  func.func @transform_0(%arg0: i32) -> (i32, i32) {
    %c0_i32 = arith.constant 0 : i32
    %c0_i32_0 = arith.constant 0 : i32
    return %arg0, %c0_i32 : i32, i32
  }
  func.func @transform_1(%arg0: i32) -> (i32, i32) {
    %c0_i32 = arith.constant 0 : i32
    %c0_i32_0 = arith.constant 0 : i32
    %c0_i32_1 = arith.constant 0 : i32
    return %c0_i32, %c0_i32_0 : i32, i32
  }
  func.func @transform_2(%arg0: i32) -> (i32, i32) {
    %c0_i32 = arith.constant 0 : i32
    %c0_i32_0 = arith.constant 0 : i32
    %c0_i32_1 = arith.constant 0 : i32
    return %c0_i32, %c0_i32_0 : i32, i32
  }
  func.func @transform_3(%arg0: i32) -> (i32, i32) {
    %c0_i32 = arith.constant 0 : i32
    %c0_i32_0 = arith.constant 0 : i32
    %c0_i32_1 = arith.constant 0 : i32
    return %c0_i32, %c0_i32_0 : i32, i32
  }
  func.func @transform_4(%arg0: i32) -> (i32, i32) {
    %c0_i32 = arith.constant 0 : i32
    %c0_i32_0 = arith.constant 0 : i32
    return %arg0, %c0_i32 : i32, i32
  }
}

</mosaic_0001>

<llo_original>
// kernel: tile.13
$region0: #{tile.13}
  #allocation0 [shape = 's32[1]{0}', space=sflag, size = 0x4, scoped, tag = 'scoped memory for tile.13']
  %s0 = inlined_call_operand.vmem [shape: f32[4], index: 0, kind: input, shape index: {}]
  %s1 = inlined_call_operand.vmem [shape: f32[4,4], index: 1, kind: output, shape index: {}]
  // Predicated region
  $region2: #{tile.13} parent=0 // pred_check
    _
  $region3: #{tile.13} parent=0 // pred_check_branch
    %3 = sbr.rel (0) target = $region5
  $region4: #{tile.13} parent=0 // pred_region
    _
  $region5: #{tile.13} parent=0 // pred_fallthru
    _
  %v4 = vld [vmem:[%s0] ss:$0 sm:$0xff]
  %5 = vst [vmem:[%s1] sm:$0xf] %v4

// kernel: tile.14
$region0: #{tile.14}
  %s0 = inlined_call_operand.vmem [shape: f32[4,4], index: 0, kind: input, shape index: {}]
  %s1 = inlined_call_operand.vmem [shape: f32[1,16], index: 1, kind: output, shape index: {}]
  $region1: #{tile.14} parent=0
    #allocation0 [shape = 'u8[4096]{0}', space=vmem, size = 0x1000, scoped, tag = 'scoped mem for output reshape']
    #allocation1 [shape = 'u8[4096]{0}', space=vmem, size = 0x1000, scoped, tag = 'scoped mem for input reshape']
    %s3 = sshllo.u32 0, 4
    %v4 = vld [vmem:[%s0] sm:%s3]
    %5 = vst [vmem:[#allocation1] sm:%s3] %v4
    %v6 = vld [vmem:[#allocation1] sm:$0x1]
    %vm7 = vcmask 31744
    %8 = vst.msk [vmem:[#allocation0] sm:$0x1] %vm7, %v6
    %s9 = scalar_lea.vmem [#allocation1], 3
    %v10 = vld [vmem:[%s9] sm:$0x1]
    %11 = vrot.lane.b32.xlu0 %v10, 12
    %v12 = vpop.permute.xlu0 %11
    %vm13 = vcmask 130144
    %14 = vst.msk [vmem:[#allocation0] sm:$0x1] %vm13, %v12
    %s15 = scalar_lea.vmem [#allocation1], 2
    %v16 = vld [vmem:[%s15] sm:$0x1]
    %17 = vrot.lane.b32.xlu0 %v16, 8
    %v18 = vpop.permute.xlu0 %17
    %vm19 = vcmask 97344
    %20 = vst.msk [vmem:[#allocation0] sm:$0x1] %vm19, %v18
    %s21 = scalar_lea.vmem [#allocation1], 1
    %v22 = vld [vmem:[%s21] sm:$0x1]
    %23 = vrot.lane.b32.xlu0 %v22, 4
    %v24 = vpop.permute.xlu0 %23
    %vm25 = vcmask 64544
    %26 = vst.msk [vmem:[#allocation0] sm:$0x1] %vm25, %v24
    %s28 = sshllo.u32 0, 1
    %v30 = vld [vmem:[#allocation0] sm:%s28]
    %s31 = sshllo.u32 0, 1
    %32 = vst [vmem:[%s1] sm:%s31] %v30

// kernel: transition_block_forward.1
$region0: #{transition_block_forward.1}
  #allocation0 [shape = 'u32[]', space=smem, size = 0x4, offset = 0x4, fixed_abs, tag = 'smem constant byte address 0x4 - core index']
  #allocation1 [shape = 'u32[144,128]{1,0:T(1,128)}', space=vmem, size = 0x12000, scoped, tag = 'internal scratch']
  %s0 = inlined_call_operand.vmem [shape: f32[128,16], index: 0, kind: input, shape index: {}]
  %s1 = inlined_call_operand.vmem [shape: f32[1,16], index: 1, kind: input, shape index: {}]
  %s2 = inlined_call_operand.vmem [shape: f32[1,16], index: 2, kind: input, shape index: {}]
  %s3 = inlined_call_operand.vmem [shape: f32[16,128], index: 3, kind: input, shape index: {}]
  %s4 = inlined_call_operand.vmem [shape: f32[128,128], index: 4, kind: output, shape index: {}]
  %s5 = sld [smem:[#allocation0]]
  $region49: #{transition_block_forward.1} parent=0
    _
  %s7 = ssub.s32 1, %s5
  %s8 = scalar_select 0, %s7, %s5
  loop: start=0, step=1, limit=4
  $region2: #{transition_block_forward.1} parent=0 // loop_pre_header
    _
  $region3: #{transition_block_forward.1} parent=0 // loop_header
    %s10 = sphi 0, %s14
    %p11 = scmp.ge.s32.totalorder %s10, 4
    %s20 = sphi 0, %s22
    %s23 = sphi 0, %s20
    %s24 = sphi 0, %s23
    %s40 = sphi 0, %s24
    %s44 = sphi 0, %s44
    %s46 = sphi 0, %s44
    %s47 = sphi 0, %s46
    %s61 = sphi 0, %s47
    %s65 = sphi 0, %s65
    %s67 = sphi 0, %s65
    %s68 = sphi 0, %s67
    %s82 = sphi 0, %s68
    %s86 = sphi 0, %s86
    %s88 = sphi 0, %s86
    %s89 = sphi 0, %s88
    %s103 = sphi 0, %s89
    %s109 = sphi 0, %s111
    %s112 = sphi 0, %s109
    %s113 = sphi 0, %s112
    %s129 = sphi 0, %s113
  $region4: #{transition_block_forward.1} parent=0 // loop_header_branch
    %13 = sbr.rel (%p11) target = $region8
  $region5: #{transition_block_forward.1} parent=0 // loop_body
    %s15 = ssub.s32 %s10, 1
    %s16 = ssub.s32 %s10, 2
    %s17 = sadd.s32 %s10, 1
    %s18 = ssub.s32 %s10, %s17
    %p19 = scmp.eq.s32.totalorder %s18, 0
    %s21 = sadd.s32 %s20, 1
    %s22 = scalar_select %p19, %s20, %s21
    %p25 = pneg %p19
    %p26 = scmp.eq.s32.totalorder %s10, 1
    %p27 = por %p25, %p26
    %p28 = scmp.ne.s32.totalorder %s20, %s23
    %p29 = scmp.eq.s32.totalorder %s10, 0
    %p30 = por %p28, %p29
    %p31 = scmp.ne.s32.totalorder %s20, %s23
    %p32 = scmp.eq.s32.totalorder %s15, 1
    %p33 = por %p31, %p32
    %p34 = scmp.ne.s32.totalorder %s23, %s24
    %p35 = scmp.eq.s32.totalorder %s15, 0
    %p36 = por %p34, %p35
    %p37 = scmp.ne.s32.totalorder %s23, %s24
    %p38 = scmp.eq.s32.totalorder %s16, 1
    %p39 = por %p37, %p38
    %p41 = scmp.ne.s32.totalorder %s24, %s40
    %p42 = scmp.eq.s32.totalorder %s16, 0
    %p43 = por %p41, %p42
    %s45 = sadd.s32 %s44, 1
    %p48 = scmp.eq.s32.totalorder %s10, 1
    %p49 = scmp.ne.s32.totalorder %s44, %s46
    %p50 = scmp.eq.s32.totalorder %s10, 0
    %p51 = por %p49, %p50
    %p52 = scmp.ne.s32.totalorder %s44, %s46
    %p53 = scmp.eq.s32.totalorder %s15, 1
    %p54 = por %p52, %p53
    %p55 = scmp.ne.s32.totalorder %s46, %s47
    %p56 = scmp.eq.s32.totalorder %s15, 0
    %p57 = por %p55, %p56
    %p58 = scmp.ne.s32.totalorder %s46, %s47
    %p59 = scmp.eq.s32.totalorder %s16, 1
    %p60 = por %p58, %p59
    %p62 = scmp.ne.s32.totalorder %s47, %s61
    %p63 = scmp.eq.s32.totalorder %s16, 0
    %p64 = por %p62, %p63
    %s66 = sadd.s32 %s65, 1
    %p69 = scmp.eq.s32.totalorder %s10, 1
    %p70 = scmp.ne.s32.totalorder %s65, %s67
    %p71 = scmp.eq.s32.totalorder %s10, 0
    %p72 = por %p70, %p71
    %p73 = scmp.ne.s32.totalorder %s65, %s67
    %p74 = scmp.eq.s32.totalorder %s15, 1
    %p75 = por %p73, %p74
    %p76 = scmp.ne.s32.totalorder %s67, %s68
    %p77 = scmp.eq.s32.totalorder %s15, 0
    %p78 = por %p76, %p77
    %p79 = scmp.ne.s32.totalorder %s67, %s68
    %p80 = scmp.eq.s32.totalorder %s16, 1
    %p81 = por %p79, %p80
    %p83 = scmp.ne.s32.totalorder %s68, %s82
    %p84 = scmp.eq.s32.totalorder %s16, 0
    %p85 = por %p83, %p84
    %s87 = sadd.s32 %s86, 1
    %p90 = scmp.eq.s32.totalorder %s10, 1
    %p91 = scmp.ne.s32.totalorder %s86, %s88
    %p92 = scmp.eq.s32.totalorder %s10, 0
    %p93 = por %p91, %p92
    %p94 = scmp.ne.s32.totalorder %s86, %s88
    %p95 = scmp.eq.s32.totalorder %s15, 1
    %p96 = por %p94, %p95
    %p97 = scmp.ne.s32.totalorder %s88, %s89
    %p98 = scmp.eq.s32.totalorder %s15, 0
    %p99 = por %p97, %p98
    %p100 = scmp.ne.s32.totalorder %s88, %s89
    %p101 = scmp.eq.s32.totalorder %s16, 1
    %p102 = por %p100, %p101
    %p104 = scmp.ne.s32.totalorder %s89, %s103
    %p105 = scmp.eq.s32.totalorder %s16, 0
    %p106 = por %p104, %p105
    %s107 = ssub.s32 %s10, %s17
    %p108 = scmp.eq.s32.totalorder %s107, 0
    %s110 = sadd.s32 %s109, 1
    %s111 = scalar_select %p108, %s109, %s110
    %p114 = pneg %p108
    %p115 = scmp.eq.s32.totalorder %s10, 1
    %p116 = por %p114, %p115
    %p117 = scmp.ne.s32.totalorder %s109, %s112
    %p118 = scmp.eq.s32.totalorder %s10, 0
    %p119 = por %p117, %p118
    %p120 = scmp.ne.s32.totalorder %s109, %s112
    %p121 = scmp.eq.s32.totalorder %s15, 1
    %p122 = por %p120, %p121
    %p123 = scmp.ne.s32.totalorder %s112, %s113
    %p124 = scmp.eq.s32.totalorder %s15, 0
    %p125 = por %p123, %p124
    %p126 = scmp.ne.s32.totalorder %s112, %s113
    %p127 = scmp.eq.s32.totalorder %s16, 1
    %p128 = por %p126, %p127
    %p130 = scmp.ne.s32.totalorder %s113, %s129
    %p131 = scmp.eq.s32.totalorder %s16, 0
    %p132 = por %p130, %p131
    %p133 = scmp.le.s32.totalorder 1, %s10
    %p134 = scmp.lt.s32.totalorder %s10, 3
    %p135 = pnand %p133, %p134
    %p136 = pneg %p135
    // Predicated region
    $region9: #{transition_block_forward.1} parent=5 // pred_check
      _
    $region10: #{transition_block_forward.1} parent=5 // pred_check_branch
      %138 = sbr.rel (%p135) target = $region12
    $region11: #{transition_block_forward.1} parent=5 // pred_region
      %s139 = ssub.s32 %s10, 1
      // Predicated region
      $region13: #{transition_block_forward.1} parent=11 // pred_check
        %p140 = pneg %p57
      $region14: #{transition_block_forward.1} parent=11 // pred_check_branch
        %142 = sbr.rel (%p140) target = $region16
      $region15: #{transition_block_forward.1} parent=11 // pred_region
        _
      $region16: #{transition_block_forward.1} parent=11 // pred_fallthru
        _
      // Predicated region
      $region17: #{transition_block_forward.1} parent=11 // pred_check
        %p143 = pneg %p78
      $region18: #{transition_block_forward.1} parent=11 // pred_check_branch
        %145 = sbr.rel (%p143) target = $region20
      $region19: #{transition_block_forward.1} parent=11 // pred_region
        _
      $region20: #{transition_block_forward.1} parent=11 // pred_fallthru
        _
      // Predicated region
      $region21: #{transition_block_forward.1} parent=11 // pred_check
        %p146 = pneg %p99
      $region22: #{transition_block_forward.1} parent=11 // pred_check_branch
        %148 = sbr.rel (%p146) target = $region24
      $region23: #{transition_block_forward.1} parent=11 // pred_region
        _
      $region24: #{transition_block_forward.1} parent=11 // pred_fallthru
        _
    $region12: #{transition_block_forward.1} parent=5 // pred_fallthru
      _
    %p149 = scmp.lt.s32.totalorder %s10, 2
    // Predicated region
    $region25: #{transition_block_forward.1} parent=5 // pred_check
      %p150 = pneg %p149
    $region26: #{transition_block_forward.1} parent=5 // pred_check_branch
      %152 = sbr.rel (%p150) target = $region28
    $region27: #{transition_block_forward.1} parent=5 // pred_region
      // Predicated region
      $region29: #{transition_block_forward.1} parent=27 // pred_check
        %p153 = pneg %p30
      $region30: #{transition_block_forward.1} parent=27 // pred_check_branch
        %155 = sbr.rel (%p153) target = $region32
      $region31: #{transition_block_forward.1} parent=27 // pred_region
        %s156 = smul.u32 8, %s10
        %p157 = scmp.lt.s32.totalorder %s156, 15
        %s158 = scalar_select %p157, %s156, 15
        %s159 = smul.addr %s158, 8
        %s160 = scalar_lea.vmem %s0, %s159
        %s161 = smul.u32 8, %s10
      $region32: #{transition_block_forward.1} parent=27 // pred_fallthru
        _
    $region28: #{transition_block_forward.1} parent=5 // pred_fallthru
      _
    %p162 = scmp.le.s32.totalorder 1, %s10
    %p163 = scmp.lt.s32.totalorder %s10, 3
    %p164 = pnand %p162, %p163
    %p165 = pneg %p164
    // Predicated region
    $region33: #{transition_block_forward.1} parent=5 // pred_check
      _
    $region34: #{transition_block_forward.1} parent=5 // pred_check_branch
      %167 = sbr.rel (%p164) target = $region36
    $region35: #{transition_block_forward.1} parent=5 // pred_region
      %s168 = ssub.s32 %s10, 1
      %s169 = smul.u32 8, %s15
      %p170 = scmp.lt.s32.totalorder %s169, 15
      %s171 = scalar_select %p170, %s169, 15
      %s172 = smul.addr %s171, 8
      %s173 = scalar_lea.vmem %s0, %s172
      %p174 = pneg %p36
      %p175 = pneg %p33
      %p176 = pneg %p57
      %p177 = pneg %p54
      %p178 = pneg %p78
      %p179 = pneg %p75
      %p180 = pneg %p99
      %p181 = pneg %p96
      %p182 = pneg %p125
      %p183 = pneg %p122
      %s184 = smul.u32 8, %s15
      %p185 = scmp.lt.s32.totalorder %s184, 15
      %s186 = scalar_select %p185, %s184, 15
      %s187 = smul.addr %s186, 8
      %s188 = scalar_lea.vmem %s4, %s187
      %s189 = smul.u32 8, %s15
      %p190 = scmp.lt.s32.totalorder %s189, 15
      %s191 = scalar_select %p190, %s189, 15
      %s192 = smul.addr %s191, 8
      %s193 = scalar_lea.vmem %s0, %s192
      %s194 = smul.u32 8, %s15
      %s195 = smul.u32 8, %s15
      %p196 = scmp.lt.s32.totalorder %s195, 15
      %s197 = scalar_select %p196, %s195, 15
      %s198 = smul.addr %s197, 8
      %s199 = scalar_lea.vmem %s4, %s198
      %s200 = smul.u32 8, %s15
      %v201 = vld [vmem:[%s193] sm:$0xff]
      %v202 = vld [vmem:[%s193 + $0x8] sm:$0xff]
      %v203 = vld [vmem:[%s193 + $0x10] sm:$0xff]
      %v204 = vld [vmem:[%s193 + $0x18] sm:$0xff]
      %v205 = vld [vmem:[%s193 + $0x20] sm:$0xff]
      %v206 = vld [vmem:[%s193 + $0x28] sm:$0xff]
      %v207 = vld [vmem:[%s193 + $0x30] sm:$0xff]
      %v208 = vld [vmem:[%s193 + $0x38] sm:$0xff]
      %v209 = vld [vmem:[%s1] sm:$0x1]
      %v211 = vlaneseq
      %v212 = vshrl.u32 %v211, 7
      %v213 = vsub.s32 0, %v212
      %v214 = vrot.slane %v209, %v213
      %v216 = vmul.f32 %v201, %v214
      %v217 = vmul.f32 %v202, %v214
      %v218 = vmul.f32 %v203, %v214
      %v219 = vmul.f32 %v204, %v214
      %v220 = vmul.f32 %v205, %v214
      %v221 = vmul.f32 %v206, %v214
      %v222 = vmul.f32 %v207, %v214
      %v223 = vmul.f32 %v208, %v214
      %v224 = vld [vmem:[%s2] sm:$0x1]
      %v226 = vlaneseq
      %v227 = vshrl.u32 %v226, 7
      %v228 = vsub.s32 0, %v227
      %v229 = vrot.slane %v224, %v228
      %v231 = vadd.f32 %v216, %v229
      %v232 = vadd.f32 %v217, %v229
      %v233 = vadd.f32 %v218, %v229
      %v234 = vadd.f32 %v219, %v229
      %v235 = vadd.f32 %v220, %v229
      %v236 = vadd.f32 %v221, %v229
      %v237 = vadd.f32 %v222, %v229
      %v238 = vadd.f32 %v223, %v229
      %v239 = vmax.f32 %v231, 0.0
      %v240 = vmax.f32 %v232, 0.0
      %v241 = vmax.f32 %v233, 0.0
      %v242 = vmax.f32 %v234, 0.0
      %v243 = vmax.f32 %v235, 0.0
      %v244 = vmax.f32 %v236, 0.0
      %v245 = vmax.f32 %v237, 0.0
      %v246 = vmax.f32 %v238, 0.0
      %v247 = vld [vmem:[%s3] sm:$0xff]
      %v248 = vld [vmem:[%s3 + $0x8] sm:$0xff]
      %vm249 = vcmask 130048
      %v251 = vsel %vm249, %v239, 0
      %v254 = vsel %vm249, %v240, 0
      %v257 = vsel %vm249, %v241, 0
      %v260 = vsel %vm249, %v242, 0
      %v263 = vsel %vm249, %v243, 0
      %v266 = vsel %vm249, %v244, 0
      %v269 = vsel %vm249, %v245, 0
      %v272 = vsel %vm249, %v246, 0
      %274 = vmatprep.subr.mxu0 0.0
      %275 = vmatpush1.msra.mxu0 %v247
      %276 = vmatprep.subr.mxu0 0.0
      %277 = vmatpush1.msra.mxu0 %v248
      %278 = vmatprep.subr.mxu0 0.0
      %279 = vmatpush1.msra.mxu0 0.0
      %280 = vmatprep.subr.mxu0 0.0
      %281 = vmatpush1.msra.mxu0 0.0
      %282 = vmatprep.subr.mxu0 0.0
      %283 = vmatpush1.msra.mxu0 0.0
      %284 = vmatprep.subr.mxu0 0.0
      %285 = vmatpush1.msra.mxu0 0.0
      %286 = vmatprep.subr.mxu0 0.0
      %287 = vmatpush1.msra.mxu0 0.0
      %288 = vmatprep.subr.mxu0 0.0
      %289 = vmatpush1.msra.mxu0 0.0
      %290 = vmatprep.subr.mxu0 0.0
      %291 = vmatpush1.msra.mxu0 0.0
      %292 = vmatprep.subr.mxu0 0.0
      %293 = vmatpush1.msra.mxu0 0.0
      %294 = vmatprep.subr.mxu0 0.0
      %295 = vmatpush1.msra.mxu0 0.0
      %296 = vmatprep.subr.mxu0 0.0
      %297 = vmatpush1.msra.mxu0 0.0
      %298 = vmatprep.subr.mxu0 0.0
      %299 = vmatpush1.msra.mxu0 0.0
      %300 = vmatprep.subr.mxu0 0.0
      %301 = vmatpush1.msra.mxu0 0.0
      %302 = vmatprep.subr.mxu0 0.0
      %303 = vmatpush1.msra.mxu0 0.0
      %304 = vmatprep.subr.mxu0 0.0
      %305 = vmatpush1.msra.mxu0 0.0
      %306 = vmatprep.subr.mxu0 0.0
      %307 = vmatpush1.msra.mxu0 0.0
      %308 = vmatprep.subr.mxu0 0.0
      %309 = vmatpush1.msra.mxu0 0.0
      %310 = vmatprep.subr.mxu0 0.0
      %311 = vmatpush1.msra.mxu0 0.0
      %312 = vmatprep.subr.mxu0 0.0
      %313 = vmatpush1.msra.mxu0 0.0
      %314 = vmatprep.subr.mxu0 0.0
      %315 = vmatpush1.msra.mxu0 0.0
      %316 = vmatprep.subr.mxu0 0.0
      %317 = vmatpush1.msra.mxu0 0.0
      %318 = vmatprep.subr.mxu0 0.0
      %319 = vmatpush1.msra.mxu0 0.0
      %320 = vmatprep.subr.mxu0 0.0
      %321 = vmatpush1.msra.mxu0 0.0
      %322 = vmatprep.subr.mxu0 0.0
      %323 = vmatpush1.msra.mxu0 0.0
      %324 = vmatprep.subr.mxu0 0.0
      %325 = vmatpush1.msra.mxu0 0.0
      %326 = vmatprep.subr.mxu0 0.0
      %327 = vmatpush1.msra.mxu0 0.0
      %328 = vmatprep.subr.mxu0 0.0
      %329 = vmatpush1.msra.mxu0 0.0
      %330 = vmatprep.subr.mxu0 0.0
      %331 = vmatpush1.msra.mxu0 0.0
      %332 = vmatprep.subr.mxu0 0.0
      %333 = vmatpush1.msra.mxu0 0.0
      %334 = vmatprep.subr.mxu0 0.0
      %335 = vmatpush1.msra.mxu0 0.0
      %336 = vmatprep.subr.mxu0 0.0
      %337 = vmatpush1.msra.mxu0 0.0
      %338 = vmatprep.mubr.f32.mxu0 0.0
      %339 = vmatmul.mubr.f32.gmra.mrb[0].mxu0 %v251
      %v340 = vpop.f32.mrb[0].mxu0
      %v341 = vadd.f32 0.0, %v340
      %v342 = vpop.f32.mrb[0].mxu0
      %343 = vmatprep.mubr.f32.mxu0 0.0
      %344 = vmatmul.mubr.f32.gmra.mrb[0].mxu0 %v254
      %v345 = vpop.f32.mrb[0].mxu0
      %v346 = vadd.f32 0.0, %v345
      %v347 = vpop.f32.mrb[0].mxu0
      %348 = vmatprep.mubr.f32.mxu0 0.0
      %349 = vmatmul.mubr.f32.gmra.mrb[0].mxu0 %v257
      %v350 = vpop.f32.mrb[0].mxu0
      %v351 = vadd.f32 0.0, %v350
      %v352 = vpop.f32.mrb[0].mxu0
      %353 = vmatprep.mubr.f32.mxu0 0.0
      %354 = vmatmul.mubr.f32.gmra.mrb[0].mxu0 %v260
      %v355 = vpop.f32.mrb[0].mxu0
      %v356 = vadd.f32 0.0, %v355
      %v357 = vpop.f32.mrb[0].mxu0
      %358 = vmatprep.mubr.f32.mxu0 0.0
      %359 = vmatmul.mubr.f32.gmra.mrb[0].mxu0 %v263
      %v360 = vpop.f32.mrb[0].mxu0
      %v361 = vadd.f32 0.0, %v360
      %v362 = vpop.f32.mrb[0].mxu0
      %363 = vmatprep.mubr.f32.mxu0 0.0
      %364 = vmatmul.mubr.f32.gmra.mrb[0].mxu0 %v266
      %v365 = vpop.f32.mrb[0].mxu0
      %v366 = vadd.f32 0.0, %v365
      %v367 = vpop.f32.mrb[0].mxu0
      %368 = vmatprep.mubr.f32.mxu0 0.0
      %369 = vmatmul.mubr.f32.gmra.mrb[0].mxu0 %v269
      %v370 = vpop.f32.mrb[0].mxu0
      %v371 = vadd.f32 0.0, %v370
      %v372 = vpop.f32.mrb[0].mxu0
      %373 = vmatprep.mubr.f32.mxu0 0.0
      %374 = vmatmul.mubr.f32.gmra.mrb[0].mxu0 %v272
      %v375 = vpop.f32.mrb[0].mxu0
      %v376 = vadd.f32 0.0, %v375
      %v377 = vpop.f32.mrb[0].mxu0
      %378 = vdwg.mxu0
      %379 = vst [vmem:[%s199] sm:$0xff] %v341
      %380 = vst [vmem:[%s199 + $0x8] sm:$0xff] %v346
      %381 = vst [vmem:[%s199 + $0x10] sm:$0xff] %v351
      %382 = vst [vmem:[%s199 + $0x18] sm:$0xff] %v356
      %383 = vst [vmem:[%s199 + $0x20] sm:$0xff] %v361
      %384 = vst [vmem:[%s199 + $0x28] sm:$0xff] %v366
      %385 = vst [vmem:[%s199 + $0x30] sm:$0xff] %v371
      %386 = vst [vmem:[%s199 + $0x38] sm:$0xff] %v376
      %s387 = smul.u32 8, %s15
      %p388 = scmp.lt.s32.totalorder %s387, 15
      %s389 = scalar_select %p388, %s387, 15
      %s390 = smul.addr %s389, 8
      %s391 = scalar_lea.vmem %s4, %s390
      // Predicated region
      $region37: #{transition_block_forward.1} parent=35 // pred_check
        %p392 = pneg %p122
      $region38: #{transition_block_forward.1} parent=35 // pred_check_branch
        %394 = sbr.rel (%p392) target = $region40
      $region39: #{transition_block_forward.1} parent=35 // pred_region
        %s395 = smul.u32 8, %s15
      $region40: #{transition_block_forward.1} parent=35 // pred_fallthru
        _
    $region36: #{transition_block_forward.1} parent=5 // pred_fallthru
      _
    %p396 = scmp.le.s32.totalorder 2, %s10
    // Predicated region
    $region41: #{transition_block_forward.1} parent=5 // pred_check
      %p397 = pneg %p396
    $region42: #{transition_block_forward.1} parent=5 // pred_check_branch
      %399 = sbr.rel (%p397) target = $region44
    $region43: #{transition_block_forward.1} parent=5 // pred_region
      %s400 = ssub.s32 %s10, 2
      // Predicated region
      $region45: #{transition_block_forward.1} parent=43 // pred_check
        %p401 = pneg %p128
      $region46: #{transition_block_forward.1} parent=43 // pred_check_branch
        %403 = sbr.rel (%p401) target = $region48
      $region47: #{transition_block_forward.1} parent=43 // pred_region
        %s404 = smul.u32 8, %s16
        %p405 = scmp.lt.s32.totalorder %s404, 15
        %s406 = scalar_select %p405, %s404, 15
        %s407 = smul.addr %s406, 8
        %s408 = scalar_lea.vmem %s4, %s407
      $region48: #{transition_block_forward.1} parent=43 // pred_fallthru
        _
    $region44: #{transition_block_forward.1} parent=5 // pred_fallthru
      _
  $region6: #{transition_block_forward.1} parent=0 // loop_footer
    %s14 = sadd.s32 1, %s10
  $region7: #{transition_block_forward.1} parent=0 // loop_footer_branch
    %9 = sbr.rel target = $region3
  $region8: #{transition_block_forward.1} parent=0 // loop_exit
    _

</llo_original>
